<compile_context>
chip_gen: v7x
topology: tpu7x:2x2x1
jax: 0.10.0
libtpu: 0.0.40
codegen_flags: <defaults>
</compile_context>

<pallas_src>
from functools import partial

import numpy as np
import jax
import jax.numpy as jnp
from jax import lax
from jax.experimental import pallas as pl
from jax.experimental.pallas import tpu as pltpu


_ROW_CHUNK = 256      # rows per in-kernel matmul chunk (multiple of 8)
_PAIR_LANES = 128     # lane width of the selection matrix (>= number of pairs)


def _ceil_div(a, b):
    return -(-a // b)


def _round_up(a, b):
    return _ceil_div(a, b) * b


# ----------------------------------------------------------------------------
# Metadata parsing (pure trace-time Python, mirrors StructuralLoss.forward)
# ----------------------------------------------------------------------------
def extract_constraint_pairs(feature_metadata):
    """Return list of (left_idx, right_idx) s.t. the loss adds
    mean(relu(pred[..., left] - pred[..., right])) for each pair."""
    columns = feature_metadata["columns"]
    column_mapping = feature_metadata["column_mapping"]

    exchange_pairs = {}
    for idx, col in enumerate(columns):
        attrs = column_mapping[col]
        key = f"{attrs['exchange']}_{attrs['trading_pair']}"
        if key not in exchange_pairs:
            exchange_pairs[key] = {"bid_prices": {}, "ask_prices": {}}
        if attrs["feature_type"] == "price":
            level = attrs["level"]
            if attrs["order_type"] == "bid":
                exchange_pairs[key]["bid_prices"][level] = idx
            elif attrs["order_type"] == "ask":
                exchange_pairs[key]["ask_prices"][level] = idx

    pairs = []
    for key, price_indices in exchange_pairs.items():
        bid_prices = price_indices["bid_prices"]
        ask_prices = price_indices["ask_prices"]
        if len(bid_prices) >= 2 and len(ask_prices) >= 2:
            for level in range(1, 5):       # ask_k <= ask_{k+1}
                if level in ask_prices and level + 1 in ask_prices:
                    pairs.append((ask_prices[level], ask_prices[level + 1]))
            for level in range(1, 5):       # bid_{k+1} <= bid_k
                if level in bid_prices and level + 1 in bid_prices:
                    pairs.append((bid_prices[level + 1], bid_prices[level]))
            if 1 in bid_prices and 1 in ask_prices:   # bid_1 <= ask_1
                pairs.append((bid_prices[1], ask_prices[1]))
    return pairs


def _build_selection_matrix(pairs, num_features):
    """D[:, p] = e_left - e_right; extra columns are zero (contribute 0)."""
    n_pairs = len(pairs)
    p_pad = max(_PAIR_LANES, _round_up(n_pairs, _PAIR_LANES))
    d = np.zeros((num_features, p_pad), dtype=np.float32)
    for p, (l, r) in enumerate(pairs):
        d[l, p] += 1.0
        d[r, p] -= 1.0
    return jnp.asarray(d)


# ----------------------------------------------------------------------------
# Kernel: per-tile sum over all rows & constraint pairs of relu(x @ D).
#   x_ref: (tile_n, F) row-major activation tile
#   d_ref: (F, P) resident +/-1 selection matrix
#   o_ref: (1, 8, 128) partial-sum block (total broadcast over the block)
# ----------------------------------------------------------------------------
def _structural_loss_tile_kernel(x_ref, d_ref, o_ref, *, chunk):
    tile_n = x_ref.shape[0]
    n_chunks = tile_n // chunk
    d = d_ref[...]                                    # (F, P) f32, 3 vregs, resident

    def body(c, acc):
        start = pl.multiple_of(c * chunk, chunk)
        xc = x_ref[pl.ds(start, chunk), :].astype(jnp.float32)       # (chunk, F)
        y = jnp.dot(xc, d, preferred_element_type=jnp.float32)       # MXU, (chunk, P)
        y = jnp.maximum(y, 0.0)                                       # VPU relu
        return acc + jnp.sum(y, axis=0, keepdims=True)                # (1, P)

    acc = lax.fori_loop(0, n_chunks, body,
                        jnp.zeros((1, d.shape[1]), jnp.float32))
    total = jnp.sum(acc)                              # one cross-lane reduce per tile
    o_ref[...] = jnp.broadcast_to(total, o_ref.shape)  # wrapper reads [:, 0, 0]


# ----------------------------------------------------------------------------
# Wrapper
# ----------------------------------------------------------------------------
def structural_loss(predictions, feature_metadata, weight=0.01,
                    vmem_per_buffer_bytes=8 << 20, max_tile_rows=None):
    """predictions: (B, T, F) float32 or bfloat16.  Returns scalar float32 loss."""
    B, T, F = predictions.shape
    if F < 10:
        return jnp.float32(0.0)

    pairs = extract_constraint_pairs(feature_metadata)
    if not pairs:
        return jnp.float32(0.0)

    if predictions.dtype not in (jnp.float32, jnp.bfloat16):
        predictions = predictions.astype(jnp.float32)
    itemsize = predictions.dtype.itemsize

    n_rows = B * T
    x = predictions.reshape(n_rows, F)      # free row-major reshape; NO transpose

    # --- tile selection -----------------------------------------------------
    # True VMEM footprint of a (tile_n, F) block is lane-padded to 128 lanes:
    # 128*itemsize bytes/row.  Budget per double-buffered input buffer keeps
    # 2 buffers well inside v7x's 64 MiB physical VMEM; v5e/v6e also fine.
    chunk = _ROW_CHUNK
    rows_budget = max(chunk,
                      (vmem_per_buffer_bytes // (128 * itemsize)) // chunk * chunk)
    if max_tile_rows is not None:
        rows_budget = min(rows_budget, max(chunk, (max_tile_rows // chunk) * chunk))

    n_ceil = _round_up(n_rows, chunk)
    # Keep >= 2 tiles when there is enough work so the "parallel" axis can be
    # sharded across v7x's two TensorCores; single tile otherwise.
    min_tiles = 2 if n_ceil >= 2 * chunk else 1
    num_tiles = max(_ceil_div(n_ceil, rows_budget), min_tiles)
    tile_n = _round_up(_ceil_div(n_ceil, num_tiles), chunk)
    num_tiles = _ceil_div(n_ceil, tile_n)
    n_pad = num_tiles * tile_n

    if n_pad != n_rows:
        # Zero rows contribute relu(0 @ D) = 0 -> exact.  Common training
        # shapes (chunk-aligned B*T) skip this pad entirely.
        x = jnp.pad(x, ((0, n_pad - n_rows), (0, 0)))

    d = _build_selection_matrix(pairs, F)
    p_pad = d.shape[1]

    in_block_vmem = tile_n * 128 * itemsize           # lane-padded footprint
    vmem_limit = int(min(60 * (1 << 20),
                         max(32 * (1 << 20), 3 * in_block_vmem + (4 << 20))))

    kernel = partial(_structural_loss_tile_kernel, chunk=chunk)

    partials = pl.pallas_call(
        kernel,
        out_shape=jax.ShapeDtypeStruct((num_tiles, 8, 128), jnp.float32),
        grid=(num_tiles,),
        in_specs=[
            pl.BlockSpec((tile_n, F), lambda i: (i, 0)),   # activations (row-major)
            pl.BlockSpec((F, p_pad), lambda i: (0, 0)),    # resident +/-1 matrix
        ],
        out_specs=pl.BlockSpec((1, 8, 128), lambda i: (i, 0, 0)),
        compiler_params=pltpu.CompilerParams(
            dimension_semantics=("parallel",),             # disjoint outputs
            vmem_limit_bytes=vmem_limit,
        ),
        cost_estimate=pl.CostEstimate(
            flops=2 * n_pad * F * p_pad,
            transcendentals=0,
            bytes_accessed=n_pad * F * itemsize + F * p_pad * 4
                           + num_tiles * 8 * 128 * 4,
        ),
    )(x, d)

    total = jnp.sum(partials[:, 0, 0])        # exact per-tile totals
    return (weight / float(n_rows)) * total


# ----------------------------------------------------------------------------
# Plain-JAX reference (mirrors the PyTorch loop term-by-term) for validation
# ----------------------------------------------------------------------------
def structural_loss_ref(predictions, feature_metadata, weight=0.01):
    if predictions.shape[-1] < 10:
        return jnp.float32(0.0)
    total = jnp.float32(0.0)
    for l, r in extract_constraint_pairs(feature_metadata):
        total = total + jnp.mean(
            jnp.maximum(predictions[:, :, l].astype(jnp.float32)
                        - predictions[:, :, r].astype(jnp.float32), 0.0)
        )
    return weight * total


# ----------------------------------------------------------------------------
# Deterministic synthetic metadata: 2 exchange/pair groups x 5 bid + 5 ask
# price levels, plus 4 volume columns  ->  F = 24 features total.
# ----------------------------------------------------------------------------
def make_feature_metadata():
    columns = []
    column_mapping = {}
    for exchange, trading_pair in [("binance", "BTCUSDT"), ("coinbase", "BTCUSD")]:
        for side in ("bid", "ask"):
            for level in range(1, 6):
                name = f"{exchange}_{trading_pair}_{side}_price_{level}"
                columns.append(name)
                column_mapping[name] = {
                    "exchange": exchange,
                    "trading_pair": trading_pair,
                    "feature_type": "price",
                    "order_type": side,
                    "level": level,
                }
        for level in range(1, 3):
            name = f"{exchange}_{trading_pair}_bid_volume_{level}"
            columns.append(name)
            column_mapping[name] = {
                "exchange": exchange,
                "trading_pair": trading_pair,
                "feature_type": "volume",
                "order_type": "bid",
                "level": level,
            }
    return {"columns": columns, "column_mapping": column_mapping}


if __name__ == "__main__":
    feature_metadata = make_feature_metadata()
    F = len(feature_metadata["columns"])   # 24

    # Small primary case (single tile)
    B, T = 2, 8
    key = jax.random.PRNGKey(0)
    predictions = jax.random.normal(key, (B, T, F), dtype=jnp.float32)

    loss = jax.block_until_ready(
        structural_loss(predictions, feature_metadata, weight=0.01))
    ref = jax.block_until_ready(
        structural_loss_ref(predictions, feature_metadata, weight=0.01))
    np.testing.assert_allclose(np.asarray(loss), np.asarray(ref),
                               rtol=2e-5, atol=2e-6)

    # Multi-tile + padded path (still small): exercises the "parallel" grid axis.
    key2 = jax.random.PRNGKey(1)
    predictions2 = jax.random.normal(key2, (4, 300, F), dtype=jnp.float32)
    loss2 = jax.block_until_ready(
        structural_loss(predictions2, feature_metadata, weight=0.01))
    ref2 = jax.block_until_ready(
        structural_loss_ref(predictions2, feature_metadata, weight=0.01))
    np.testing.assert_allclose(np.asarray(loss2), np.asarray(ref2),
                               rtol=2e-5, atol=2e-6)

    print("KERNEL_OK")
</pallas_src>

<mosaic_0001>
module attributes {stable_mosaic.version = 11 : i64} {
  func.func @_structural_loss_tile_kernel(%arg0: i32, %arg1: memref<256x24xf32, #tpu.memory_space<vmem>>, %arg2: memref<24x128xf32, #tpu.memory_space<vmem>>, %arg3: memref<1x8x128xf32, #tpu.memory_space<vmem>>) attributes {dimension_semantics = [#tpu.dimension_semantics<parallel>], iteration_bounds = array<i64: 1>, scalar_prefetch = 0 : i64, scratch_operands = 0 : i64, tpu.core_type = #tpu.core_type<tc>, window_params = [{transform_indices = @transform_0, window_bounds = array<i64: 256, 24>}, {pipeline_mode = #tpu.pipeline_mode<synchronous>, transform_indices = @transform_1, window_bounds = array<i64: 24, 128>}, {transform_indices = @transform_2, window_bounds = array<i64: 1, 8, 128>}]} {
    %c0 = arith.constant 0 : index
    %c0_0 = arith.constant 0 : index
    %0 = vector.load %arg2[%c0, %c0_0] : memref<24x128xf32, #tpu.memory_space<vmem>>, vector<24x128xf32>
    %cst = arith.constant 0.000000e+00 : f32
    %1 = vector.broadcast %cst : f32 to vector<1x128xf32>
    %c0_i32 = arith.constant 0 : i32
    %c256_i32 = arith.constant 256 : i32
    %2 = arith.muli %c0_i32, %c256_i32 : i32
    %3 = tpu.assume_multiple %2, 256 : i32
    %4 = arith.index_cast %3 : i32 to index
    %c0_1 = arith.constant 0 : index
    %5 = vector.load %arg1[%4, %c0_1] : memref<256x24xf32, #tpu.memory_space<vmem>>, vector<256x24xf32>
    %cst_2 = arith.constant dense<0.000000e+00> : vector<256x128xf32>
    %6 = tpu.matmul %5, %0, %cst_2 {dimension_numbers = #tpu.dot_dimension_numbers<[1], [0], [0], [1], [0, 0, 1, 1], [], []>} : vector<256x24xf32>, vector<24x128xf32>, vector<256x128xf32> -> vector<256x128xf32>
    %cst_3 = arith.constant 0.000000e+00 : f32
    %7 = vector.broadcast %cst_3 : f32 to vector<256x128xf32>
    %8 = arith.maximumf %6, %7 : vector<256x128xf32>
    %cst_4 = arith.constant dense<0.000000e+00> : vector<128xf32>
    %9 = vector.multi_reduction <add>, %8, %cst_4 [0] : vector<256x128xf32> to vector<128xf32>
    %10 = vector.shape_cast %9 : vector<128xf32> to vector<1x128xf32>
    %11 = arith.addf %1, %10 : vector<1x128xf32>
    %c1_i32 = arith.constant 1 : i32
    %12 = vector.shape_cast %11 : vector<1x128xf32> to vector<1x1x128xf32>
    %cst_5 = arith.constant dense<0.000000e+00> : vector<1xf32>
    %13 = vector.multi_reduction <add>, %12, %cst_5 [1, 2] : vector<1x1x128xf32> to vector<1xf32>
    %14 = vector.shape_cast %13 : vector<1xf32> to vector<1x1x1xf32>
    %15 = vector.extract %14[0, 0, 0] : f32 from vector<1x1x1xf32>
    %16 = vector.broadcast %15 : f32 to vector<1x8x128xf32>
    %c0_6 = arith.constant 0 : index
    %c0_7 = arith.constant 0 : index
    %c0_8 = arith.constant 0 : index
    %17 = vector.load %arg3[%c0_6, %c0_7, %c0_8] : memref<1x8x128xf32, #tpu.memory_space<vmem>>, vector<1x8x128xf32>
    tpu.vector_store %arg3[%c0_6, %c0_7, %c0_8], %16 {strides = array<i32>} : memref<1x8x128xf32, #tpu.memory_space<vmem>>, vector<1x8x128xf32>,
    return
  }
  func.func @transform_0(%arg0: i32) -> (i32, i32) {
    %c0_i32 = arith.constant 0 : i32
    %c0_i32_0 = arith.constant 0 : i32
    return %arg0, %c0_i32 : i32, i32
  }
  func.func @transform_1(%arg0: i32) -> (i32, i32) {
    %c0_i32 = arith.constant 0 : i32
    %c0_i32_0 = arith.constant 0 : i32
    %c0_i32_1 = arith.constant 0 : i32
    return %c0_i32, %c0_i32_0 : i32, i32
  }
  func.func @transform_2(%arg0: i32) -> (i32, i32, i32) {
    %c0_i32 = arith.constant 0 : i32
    %c0_i32_0 = arith.constant 0 : i32
    %c0_i32_1 = arith.constant 0 : i32
    return %arg0, %c0_i32, %c0_i32_0 : i32, i32, i32
  }
}

</mosaic_0001>

<llo_original>
// kernel: tpu_custom_call.1
$region0: #{tpu_custom_call.1}
  #allocation0 [shape = 'u32[]', space=smem, size = 0x4, offset = 0x4, fixed_abs, tag = 'smem constant byte address 0x4 - core index']
  #allocation1 [shape = 'u32[144,128]{1,0:T(1,128)}', space=vmem, size = 0x12000, scoped, tag = 'internal scratch']
  %s0 = inlined_call_operand.vmem [shape: f32[256,24], index: 0, kind: input, shape index: {}]
  %s1 = inlined_call_operand.vmem [shape: f32[24,128], index: 1, kind: input, shape index: {}]
  %s2 = inlined_call_operand.hbm [shape: f32[1,8,128], index: 2, kind: output, shape index: {}]
  %s3 = sld [smem:[#allocation0]]
  $region18: #{tpu_custom_call.1} parent=0
    _
  %s5 = ssub.s32 1, %s3
  %s6 = scalar_select 0, %s5, %s3
  $region1: #{tpu_custom_call.1} parent=0
    #allocation2 [shape = 'u8[4096]{0}', space=vmem, size = 0x1000, scoped, tag = 'output window, operand 0, single buffered']
    #allocation3 [shape = 's32[1]{0}', space=sflag, size = 0x4, scoped, tag = 'scoped memory for tpu_custom_call.1']
    %7 = vsyncpa [#allocation3], 0
    // Predicated region
    $region2: #{tpu_custom_call.1} parent=1 // pred_check
      _
    $region3: #{tpu_custom_call.1} parent=1 // pred_check_branch
      %9 = sbr.rel (0) target = $region5
    $region4: #{tpu_custom_call.1} parent=1 // pred_region
      _
    $region5: #{tpu_custom_call.1} parent=1 // pred_fallthru
      _
    // Predicated region
    $region6: #{tpu_custom_call.1} parent=1 // pred_check
      _
    $region7: #{tpu_custom_call.1} parent=1 // pred_check_branch
      %11 = sbr.rel (0) target = $region9
    $region8: #{tpu_custom_call.1} parent=1 // pred_region
      _
    $region9: #{tpu_custom_call.1} parent=1 // pred_fallthru
      _
    %v12 = vld [vmem:[%s1] sm:$0xff]
    %v13 = vld [vmem:[%s1 + $0x8] sm:$0xff]
    %v14 = vld [vmem:[%s1 + $0x10] sm:$0xff]
    %v15 = vld [vmem:[%s0] sm:$0xff]
    %v16 = vld [vmem:[%s0 + $0x8] sm:$0xff]
    %v17 = vld [vmem:[%s0 + $0x10] sm:$0xff]
    %v18 = vld [vmem:[%s0 + $0x18] sm:$0xff]
    %v19 = vld [vmem:[%s0 + $0x20] sm:$0xff]
    %v20 = vld [vmem:[%s0 + $0x28] sm:$0xff]
    %v21 = vld [vmem:[%s0 + $0x30] sm:$0xff]
    %v22 = vld [vmem:[%s0 + $0x38] sm:$0xff]
    %v23 = vld [vmem:[%s0 + $0x40] sm:$0xff]
    %v24 = vld [vmem:[%s0 + $0x48] sm:$0xff]
    %v25 = vld [vmem:[%s0 + $0x50] sm:$0xff]
    %v26 = vld [vmem:[%s0 + $0x58] sm:$0xff]
    %v27 = vld [vmem:[%s0 + $0x60] sm:$0xff]
    %v28 = vld [vmem:[%s0 + $0x68] sm:$0xff]
    %v29 = vld [vmem:[%s0 + $0x70] sm:$0xff]
    %v30 = vld [vmem:[%s0 + $0x78] sm:$0xff]
    %v31 = vld [vmem:[%s0 + $0x80] sm:$0xff]
    %v32 = vld [vmem:[%s0 + $0x88] sm:$0xff]
    %v33 = vld [vmem:[%s0 + $0x90] sm:$0xff]
    %v34 = vld [vmem:[%s0 + $0x98] sm:$0xff]
    %v35 = vld [vmem:[%s0 + $0xa0] sm:$0xff]
    %v36 = vld [vmem:[%s0 + $0xa8] sm:$0xff]
    %v37 = vld [vmem:[%s0 + $0xb0] sm:$0xff]
    %v38 = vld [vmem:[%s0 + $0xb8] sm:$0xff]
    %v39 = vld [vmem:[%s0 + $0xc0] sm:$0xff]
    %v40 = vld [vmem:[%s0 + $0xc8] sm:$0xff]
    %v41 = vld [vmem:[%s0 + $0xd0] sm:$0xff]
    %v42 = vld [vmem:[%s0 + $0xd8] sm:$0xff]
    %v43 = vld [vmem:[%s0 + $0xe0] sm:$0xff]
    %v44 = vld [vmem:[%s0 + $0xe8] sm:$0xff]
    %v45 = vld [vmem:[%s0 + $0xf0] sm:$0xff]
    %v46 = vld [vmem:[%s0 + $0xf8] sm:$0xff]
    %vm47 = vcmask 195584
    %v49 = vsel %vm47, %v15, 0
    %v52 = vsel %vm47, %v16, 0
    %v55 = vsel %vm47, %v17, 0
    %v58 = vsel %vm47, %v18, 0
    %v61 = vsel %vm47, %v19, 0
    %v64 = vsel %vm47, %v20, 0
    %v67 = vsel %vm47, %v21, 0
    %v70 = vsel %vm47, %v22, 0
    %v73 = vsel %vm47, %v23, 0
    %v76 = vsel %vm47, %v24, 0
    %v79 = vsel %vm47, %v25, 0
    %v82 = vsel %vm47, %v26, 0
    %v85 = vsel %vm47, %v27, 0
    %v88 = vsel %vm47, %v28, 0
    %v91 = vsel %vm47, %v29, 0
    %v94 = vsel %vm47, %v30, 0
    %v97 = vsel %vm47, %v31, 0
    %v100 = vsel %vm47, %v32, 0
    %v103 = vsel %vm47, %v33, 0
    %v106 = vsel %vm47, %v34, 0
    %v109 = vsel %vm47, %v35, 0
    %v112 = vsel %vm47, %v36, 0
    %v115 = vsel %vm47, %v37, 0
    %v118 = vsel %vm47, %v38, 0
    %v121 = vsel %vm47, %v39, 0
    %v124 = vsel %vm47, %v40, 0
    %v127 = vsel %vm47, %v41, 0
    %v130 = vsel %vm47, %v42, 0
    %v133 = vsel %vm47, %v43, 0
    %v136 = vsel %vm47, %v44, 0
    %v139 = vsel %vm47, %v45, 0
    %v142 = vsel %vm47, %v46, 0
    %144 = vmatprep.subr.mxu0 0.0
    %145 = vmatpush1.msra.mxu0 %v12
    %146 = vmatprep.subr.mxu0 0.0
    %147 = vmatpush1.msra.mxu0 %v13
    %148 = vmatprep.subr.mxu0 0.0
    %149 = vmatpush1.msra.mxu0 %v14
    %150 = vmatprep.subr.mxu0 0.0
    %151 = vmatpush1.msra.mxu0 0.0
    %152 = vmatprep.subr.mxu0 0.0
    %153 = vmatpush1.msra.mxu0 0.0
    %154 = vmatprep.subr.mxu0 0.0
    %155 = vmatpush1.msra.mxu0 0.0
    %156 = vmatprep.subr.mxu0 0.0
    %157 = vmatpush1.msra.mxu0 0.0
    %158 = vmatprep.subr.mxu0 0.0
    %159 = vmatpush1.msra.mxu0 0.0
    %160 = vmatprep.subr.mxu0 0.0
    %161 = vmatpush1.msra.mxu0 0.0
    %162 = vmatprep.subr.mxu0 0.0
    %163 = vmatpush1.msra.mxu0 0.0
    %164 = vmatprep.subr.mxu0 0.0
    %165 = vmatpush1.msra.mxu0 0.0
    %166 = vmatprep.subr.mxu0 0.0
    %167 = vmatpush1.msra.mxu0 0.0
    %168 = vmatprep.subr.mxu0 0.0
    %169 = vmatpush1.msra.mxu0 0.0
    %170 = vmatprep.subr.mxu0 0.0
    %171 = vmatpush1.msra.mxu0 0.0
    %172 = vmatprep.subr.mxu0 0.0
    %173 = vmatpush1.msra.mxu0 0.0
    %174 = vmatprep.subr.mxu0 0.0
    %175 = vmatpush1.msra.mxu0 0.0
    %176 = vmatprep.subr.mxu0 0.0
    %177 = vmatpush1.msra.mxu0 0.0
    %178 = vmatprep.subr.mxu0 0.0
    %179 = vmatpush1.msra.mxu0 0.0
    %180 = vmatprep.subr.mxu0 0.0
    %181 = vmatpush1.msra.mxu0 0.0
    %182 = vmatprep.subr.mxu0 0.0
    %183 = vmatpush1.msra.mxu0 0.0
    %184 = vmatprep.subr.mxu0 0.0
    %185 = vmatpush1.msra.mxu0 0.0
    %186 = vmatprep.subr.mxu0 0.0
    %187 = vmatpush1.msra.mxu0 0.0
    %188 = vmatprep.subr.mxu0 0.0
    %189 = vmatpush1.msra.mxu0 0.0
    %190 = vmatprep.subr.mxu0 0.0
    %191 = vmatpush1.msra.mxu0 0.0
    %192 = vmatprep.subr.mxu0 0.0
    %193 = vmatpush1.msra.mxu0 0.0
    %194 = vmatprep.subr.mxu0 0.0
    %195 = vmatpush1.msra.mxu0 0.0
    %196 = vmatprep.subr.mxu0 0.0
    %197 = vmatpush1.msra.mxu0 0.0
    %198 = vmatprep.subr.mxu0 0.0
    %199 = vmatpush1.msra.mxu0 0.0
    %200 = vmatprep.subr.mxu0 0.0
    %201 = vmatpush1.msra.mxu0 0.0
    %202 = vmatprep.subr.mxu0 0.0
    %203 = vmatpush1.msra.mxu0 0.0
    %204 = vmatprep.subr.mxu0 0.0
    %205 = vmatpush1.msra.mxu0 0.0
    %206 = vmatprep.subr.mxu0 0.0
    %207 = vmatpush1.msra.mxu0 0.0
    %208 = vmatprep.mubr.f32.mxu0 0.0
    %209 = vmatmul.mubr.f32.gmra.mrb[0].mxu0 %v49
    %v210 = vpop.f32.mrb[0].mxu0
    %v211 = vadd.f32 0.0, %v210
    %v212 = vpop.f32.mrb[0].mxu0
    %213 = vmatprep.mubr.f32.mxu0 0.0
    %214 = vmatmul.mubr.f32.gmra.mrb[0].mxu0 %v52
    %v215 = vpop.f32.mrb[0].mxu0
    %v216 = vadd.f32 0.0, %v215
    %v217 = vpop.f32.mrb[0].mxu0
    %218 = vmatprep.mubr.f32.mxu0 0.0
    %219 = vmatmul.mubr.f32.gmra.mrb[0].mxu0 %v55
    %v220 = vpop.f32.mrb[0].mxu0
    %v221 = vadd.f32 0.0, %v220
    %v222 = vpop.f32.mrb[0].mxu0
    %223 = vmatprep.mubr.f32.mxu0 0.0
    %224 = vmatmul.mubr.f32.gmra.mrb[0].mxu0 %v58
    %v225 = vpop.f32.mrb[0].mxu0
    %v226 = vadd.f32 0.0, %v225
    %v227 = vpop.f32.mrb[0].mxu0
    %228 = vmatprep.mubr.f32.mxu0 0.0
    %229 = vmatmul.mubr.f32.gmra.mrb[0].mxu0 %v61
    %v230 = vpop.f32.mrb[0].mxu0
    %v231 = vadd.f32 0.0, %v230
    %v232 = vpop.f32.mrb[0].mxu0
    %233 = vmatprep.mubr.f32.mxu0 0.0
    %234 = vmatmul.mubr.f32.gmra.mrb[0].mxu0 %v64
    %v235 = vpop.f32.mrb[0].mxu0
    %v236 = vadd.f32 0.0, %v235
    %v237 = vpop.f32.mrb[0].mxu0
    %238 = vmatprep.mubr.f32.mxu0 0.0
    %239 = vmatmul.mubr.f32.gmra.mrb[0].mxu0 %v67
    %v240 = vpop.f32.mrb[0].mxu0
    %v241 = vadd.f32 0.0, %v240
    %v242 = vpop.f32.mrb[0].mxu0
    %243 = vmatprep.mubr.f32.mxu0 0.0
    %244 = vmatmul.mubr.f32.gmra.mrb[0].mxu0 %v70
    %v245 = vpop.f32.mrb[0].mxu0
    %v246 = vadd.f32 0.0, %v245
    %v247 = vpop.f32.mrb[0].mxu0
    %248 = vmatprep.mubr.f32.mxu0 0.0
    %249 = vmatmul.mubr.f32.gmra.mrb[0].mxu0 %v73
    %v250 = vpop.f32.mrb[0].mxu0
    %v251 = vadd.f32 0.0, %v250
    %v252 = vpop.f32.mrb[0].mxu0
    %253 = vmatprep.mubr.f32.mxu0 0.0
    %254 = vmatmul.mubr.f32.gmra.mrb[0].mxu0 %v76
    %v255 = vpop.f32.mrb[0].mxu0
    %v256 = vadd.f32 0.0, %v255
    %v257 = vpop.f32.mrb[0].mxu0
    %258 = vmatprep.mubr.f32.mxu0 0.0
    %259 = vmatmul.mubr.f32.gmra.mrb[0].mxu0 %v79
    %v260 = vpop.f32.mrb[0].mxu0
    %v261 = vadd.f32 0.0, %v260
    %v262 = vpop.f32.mrb[0].mxu0
    %263 = vmatprep.mubr.f32.mxu0 0.0
    %264 = vmatmul.mubr.f32.gmra.mrb[0].mxu0 %v82
    %v265 = vpop.f32.mrb[0].mxu0
    %v266 = vadd.f32 0.0, %v265
    %v267 = vpop.f32.mrb[0].mxu0
    %268 = vmatprep.mubr.f32.mxu0 0.0
    %269 = vmatmul.mubr.f32.gmra.mrb[0].mxu0 %v85
    %v270 = vpop.f32.mrb[0].mxu0
    %v271 = vadd.f32 0.0, %v270
    %v272 = vpop.f32.mrb[0].mxu0
    %273 = vmatprep.mubr.f32.mxu0 0.0
    %274 = vmatmul.mubr.f32.gmra.mrb[0].mxu0 %v88
    %v275 = vpop.f32.mrb[0].mxu0
    %v276 = vadd.f32 0.0, %v275
    %v277 = vpop.f32.mrb[0].mxu0
    %278 = vmatprep.mubr.f32.mxu0 0.0
    %279 = vmatmul.mubr.f32.gmra.mrb[0].mxu0 %v91
    %v280 = vpop.f32.mrb[0].mxu0
    %v281 = vadd.f32 0.0, %v280
    %v282 = vpop.f32.mrb[0].mxu0
    %283 = vmatprep.mubr.f32.mxu0 0.0
    %284 = vmatmul.mubr.f32.gmra.mrb[0].mxu0 %v94
    %v285 = vpop.f32.mrb[0].mxu0
    %v286 = vadd.f32 0.0, %v285
    %v287 = vpop.f32.mrb[0].mxu0
    %288 = vmatprep.mubr.f32.mxu0 0.0
    %289 = vmatmul.mubr.f32.gmra.mrb[0].mxu0 %v97
    %v290 = vpop.f32.mrb[0].mxu0
    %v291 = vadd.f32 0.0, %v290
    %v292 = vpop.f32.mrb[0].mxu0
    %293 = vmatprep.mubr.f32.mxu0 0.0
    %294 = vmatmul.mubr.f32.gmra.mrb[0].mxu0 %v100
    %v295 = vpop.f32.mrb[0].mxu0
    %v296 = vadd.f32 0.0, %v295
    %v297 = vpop.f32.mrb[0].mxu0
    %298 = vmatprep.mubr.f32.mxu0 0.0
    %299 = vmatmul.mubr.f32.gmra.mrb[0].mxu0 %v103
    %v300 = vpop.f32.mrb[0].mxu0
    %v301 = vadd.f32 0.0, %v300
    %v302 = vpop.f32.mrb[0].mxu0
    %303 = vmatprep.mubr.f32.mxu0 0.0
    %304 = vmatmul.mubr.f32.gmra.mrb[0].mxu0 %v106
    %v305 = vpop.f32.mrb[0].mxu0
    %v306 = vadd.f32 0.0, %v305
    %v307 = vpop.f32.mrb[0].mxu0
    %308 = vmatprep.mubr.f32.mxu0 0.0
    %309 = vmatmul.mubr.f32.gmra.mrb[0].mxu0 %v109
    %v310 = vpop.f32.mrb[0].mxu0
    %v311 = vadd.f32 0.0, %v310
    %v312 = vpop.f32.mrb[0].mxu0
    %313 = vmatprep.mubr.f32.mxu0 0.0
    %314 = vmatmul.mubr.f32.gmra.mrb[0].mxu0 %v112
    %v315 = vpop.f32.mrb[0].mxu0
    %v316 = vadd.f32 0.0, %v315
    %v317 = vpop.f32.mrb[0].mxu0
    %318 = vmatprep.mubr.f32.mxu0 0.0
    %319 = vmatmul.mubr.f32.gmra.mrb[0].mxu0 %v115
    %v320 = vpop.f32.mrb[0].mxu0
    %v321 = vadd.f32 0.0, %v320
    %v322 = vpop.f32.mrb[0].mxu0
    %323 = vmatprep.mubr.f32.mxu0 0.0
    %324 = vmatmul.mubr.f32.gmra.mrb[0].mxu0 %v118
    %v325 = vpop.f32.mrb[0].mxu0
    %v326 = vadd.f32 0.0, %v325
    %v327 = vpop.f32.mrb[0].mxu0
    %328 = vmatprep.mubr.f32.mxu0 0.0
    %329 = vmatmul.mubr.f32.gmra.mrb[0].mxu0 %v121
    %v330 = vpop.f32.mrb[0].mxu0
    %v331 = vadd.f32 0.0, %v330
    %v332 = vpop.f32.mrb[0].mxu0
    %333 = vmatprep.mubr.f32.mxu0 0.0
    %334 = vmatmul.mubr.f32.gmra.mrb[0].mxu0 %v124
    %v335 = vpop.f32.mrb[0].mxu0
    %v336 = vadd.f32 0.0, %v335
    %v337 = vpop.f32.mrb[0].mxu0
    %338 = vmatprep.mubr.f32.mxu0 0.0
    %339 = vmatmul.mubr.f32.gmra.mrb[0].mxu0 %v127
    %v340 = vpop.f32.mrb[0].mxu0
    %v341 = vadd.f32 0.0, %v340
    %v342 = vpop.f32.mrb[0].mxu0
    %343 = vmatprep.mubr.f32.mxu0 0.0
    %344 = vmatmul.mubr.f32.gmra.mrb[0].mxu0 %v130
    %v345 = vpop.f32.mrb[0].mxu0
    %v346 = vadd.f32 0.0, %v345
    %v347 = vpop.f32.mrb[0].mxu0
    %348 = vmatprep.mubr.f32.mxu0 0.0
    %349 = vmatmul.mubr.f32.gmra.mrb[0].mxu0 %v133
    %v350 = vpop.f32.mrb[0].mxu0
    %v351 = vadd.f32 0.0, %v350
    %v352 = vpop.f32.mrb[0].mxu0
    %353 = vmatprep.mubr.f32.mxu0 0.0
    %354 = vmatmul.mubr.f32.gmra.mrb[0].mxu0 %v136
    %v355 = vpop.f32.mrb[0].mxu0
    %v356 = vadd.f32 0.0, %v355
    %v357 = vpop.f32.mrb[0].mxu0
    %358 = vmatprep.mubr.f32.mxu0 0.0
    %359 = vmatmul.mubr.f32.gmra.mrb[0].mxu0 %v139
    %v360 = vpop.f32.mrb[0].mxu0
    %v361 = vadd.f32 0.0, %v360
    %v362 = vpop.f32.mrb[0].mxu0
    %363 = vmatprep.mubr.f32.mxu0 0.0
    %364 = vmatmul.mubr.f32.gmra.mrb[0].mxu0 %v142
    %v365 = vpop.f32.mrb[0].mxu0
    %v366 = vadd.f32 0.0, %v365
    %v367 = vpop.f32.mrb[0].mxu0
    %368 = vdwg.mxu0
    %v369 = vmax.f32 %v211, 0.0
    %v370 = vmax.f32 %v216, 0.0
    %v371 = vmax.f32 %v221, 0.0
    %v372 = vmax.f32 %v226, 0.0
    %v373 = vmax.f32 %v231, 0.0
    %v374 = vmax.f32 %v236, 0.0
    %v375 = vmax.f32 %v241, 0.0
    %v376 = vmax.f32 %v246, 0.0
    %v377 = vmax.f32 %v251, 0.0
    %v378 = vmax.f32 %v256, 0.0
    %v379 = vmax.f32 %v261, 0.0
    %v380 = vmax.f32 %v266, 0.0
    %v381 = vmax.f32 %v271, 0.0
    %v382 = vmax.f32 %v276, 0.0
    %v383 = vmax.f32 %v281, 0.0
    %v384 = vmax.f32 %v286, 0.0
    %v385 = vmax.f32 %v291, 0.0
    %v386 = vmax.f32 %v296, 0.0
    %v387 = vmax.f32 %v301, 0.0
    %v388 = vmax.f32 %v306, 0.0
    %v389 = vmax.f32 %v311, 0.0
    %v390 = vmax.f32 %v316, 0.0
    %v391 = vmax.f32 %v321, 0.0
    %v392 = vmax.f32 %v326, 0.0
    %v393 = vmax.f32 %v331, 0.0
    %v394 = vmax.f32 %v336, 0.0
    %v395 = vmax.f32 %v341, 0.0
    %v396 = vmax.f32 %v346, 0.0
    %v397 = vmax.f32 %v351, 0.0
    %v398 = vmax.f32 %v356, 0.0
    %v399 = vmax.f32 %v361, 0.0
    %v400 = vmax.f32 %v366, 0.0
    %v401 = vadd.f32 %v369, %v370
    %v402 = vadd.f32 %v401, %v371
    %v403 = vadd.f32 %v402, %v372
    %v404 = vadd.f32 %v403, %v373
    %v405 = vadd.f32 %v404, %v374
    %v406 = vadd.f32 %v405, %v375
    %v407 = vadd.f32 %v406, %v376
    %v408 = vadd.f32 %v407, %v377
    %v409 = vadd.f32 %v408, %v378
    %v410 = vadd.f32 %v409, %v379
    %v411 = vadd.f32 %v410, %v380
    %v412 = vadd.f32 %v411, %v381
    %v413 = vadd.f32 %v412, %v382
    %v414 = vadd.f32 %v413, %v383
    %v415 = vadd.f32 %v414, %v384
    %v416 = vadd.f32 %v415, %v385
    %v417 = vadd.f32 %v416, %v386
    %v418 = vadd.f32 %v417, %v387
    %v419 = vadd.f32 %v418, %v388
    %v420 = vadd.f32 %v419, %v389
    %v421 = vadd.f32 %v420, %v390
    %v422 = vadd.f32 %v421, %v391
    %v423 = vadd.f32 %v422, %v392
    %v424 = vadd.f32 %v423, %v393
    %v425 = vadd.f32 %v424, %v394
    %v426 = vadd.f32 %v425, %v395
    %v427 = vadd.f32 %v426, %v396
    %v428 = vadd.f32 %v427, %v397
    %v429 = vadd.f32 %v428, %v398
    %v430 = vadd.f32 %v429, %v399
    %v431 = vadd.f32 %v430, %v400
    %v432 = vrot.slane %v431, 4
    %v433 = vadd.f32 %v431, %v432
    %v434 = vrot.slane %v433, 2
    %v435 = vadd.f32 %v433, %v434
    %v436 = vrot.slane %v435, 1
    %v437 = vadd.f32 %v435, %v436
    %v438 = vadd.f32 %v437, 0.0
    %vm439 = vcmask 1040384
    %v440 = vsel %vm439, %v438, 0.0
    %441 = vadd.xlane.f32.xlu0 %v440
    %v442 = vpop.xlane.xlu0 %441
    %v443 = vrot.slane %v442, 4
    %v444 = vadd.f32 %v442, %v443
    %v445 = vrot.slane %v444, 2
    %v446 = vadd.f32 %v444, %v445
    %v447 = vrot.slane %v446, 1
    %v448 = vadd.f32 %v446, %v447
    %s449 = vtos %v448
    %v450 = vstv %s449
    %451 = vst [vmem:[#allocation2] sm:$0xff] %v450
    // Predicated region
    $region10: #{tpu_custom_call.1} parent=1 // pred_check
      _
    $region11: #{tpu_custom_call.1} parent=1 // pred_check_branch
      %453 = sbr.rel (0) target = $region13
    $region12: #{tpu_custom_call.1} parent=1 // pred_region
      %s455 = ssub.s32 128, 128
      %456 = vsyncadd [#allocation3], %s455
      %s458 = sshll.u32 [#allocation2], 4
      %s459 = int_to_ptr.vmem [resolvable:$true] %s458
      %461 = dma.vmem_to_hbm [thread:$0]  %s459, 128, %s2, [#allocation3]
    $region13: #{tpu_custom_call.1} parent=1 // pred_fallthru
      _
    // Predicated region
    $region14: #{tpu_custom_call.1} parent=1 // pred_check
      _
    $region15: #{tpu_custom_call.1} parent=1 // pred_check_branch
      %463 = sbr.rel (0) target = $region17
    $region16: #{tpu_custom_call.1} parent=1 // pred_region
      %464 = dma.done [#allocation3], 128
    $region17: #{tpu_custom_call.1} parent=1 // pred_fallthru
      _
    %465 = vsyncpa [#allocation3], 1

</llo_original>
